<compile_context>
chip_gen: v5e
topology: v5e:2x2
jax: 0.10.0
libtpu: 0.0.40
codegen_flags: <defaults>
</compile_context>

<pallas_src>
import functools

import jax
import jax.numpy as jnp
from jax.experimental import pallas as pl
from jax.experimental.pallas import tpu as pltpu


# ------------------------------ fused path -----------------------------------

def se_fused_kernel(x_ref, w_ref, b_ref, o_ref):
    # x_ref/o_ref: (C, HW) native dtype; w_ref: (C, C); b_ref: (C, 1)
    x = x_ref[...]                                                    # load once
    # AdaptiveAvgPool2d(1): mean over the (flattened) spatial axis, f32 accum.
    pooled = jnp.mean(x.astype(jnp.float32), axis=-1, keepdims=True)  # (C, 1)
    # 1x1 conv over channels: s[co] = sum_ci W[co, ci] * pooled[ci] + b[co]
    s = jnp.dot(w_ref[...], pooled.astype(w_ref.dtype),
                preferred_element_type=jnp.float32)
    s = s + b_ref[...].astype(jnp.float32)                            # (C, 1) f32
    # NOTE: the reference module has NO sigmoid.
    o_ref[...] = x * s.astype(x.dtype)                                # native-dtype scale


# ---------------------------- tiled two-pass path -----------------------------

def se_pool_excite_kernel(x_ref, w_ref, b_ref, s_ref, acc_ref, *, inv_hw):
    # grid = (N, HW//THW); x_ref: (C, THW); s_ref/acc_ref: (C, 1) f32
    j = pl.program_id(1)

    @pl.when(j == 0)
    def _():
        acc_ref[...] = jnp.zeros_like(acc_ref)

    acc_ref[...] += jnp.sum(x_ref[...].astype(jnp.float32), axis=-1, keepdims=True)

    @pl.when(j == pl.num_programs(1) - 1)
    def _():
        pooled = acc_ref[...] * inv_hw                                # (C, 1) f32
        s = jnp.dot(w_ref[...], pooled.astype(w_ref.dtype),
                    preferred_element_type=jnp.float32)
        s_ref[...] = s + b_ref[...].astype(jnp.float32)


def se_scale_kernel(x_ref, s_ref, o_ref):
    # x_ref/o_ref: (C, THW) native dtype; s_ref: (C, 1) f32
    o_ref[...] = x_ref[...] * s_ref[...].astype(o_ref.dtype)


# --------------------------------- wrapper ------------------------------------

def se_block(x, weight, bias, *, hw_tile=None, force_tiled=False,
             fused_vmem_budget_bytes=40 * 1024 * 1024):
    """x: (N, C, H, W). weight: (C, C, 1, 1). bias: (C,).  out = x * (W @ avgpool(x) + b)."""
    N, C, H, W = x.shape
    HW = H * W
    x_flat = x.reshape(N, C, HW)
    w2d = weight.reshape(C, C)
    b2d = bias.reshape(C, 1)

    x_item = jnp.dtype(x.dtype).itemsize
    w_item = jnp.dtype(w2d.dtype).itemsize

    # Peak VMEM of the fused path: x in-block + out-block (double-buffered each)
    # plus the resident weight/bias.
    fused_bytes = 4 * C * HW * x_item + C * C * w_item + 2 * C * 4
    use_fused = (not force_tiled) and fused_bytes <= fused_vmem_budget_bytes

    if use_fused:
        vmem_limit = int(min(max(2 * fused_bytes, 32 * 1024 * 1024),
                             56 * 1024 * 1024))
        cost = pl.CostEstimate(
            flops=int(3 * N * C * HW + 2 * N * C * C),
            transcendentals=0,
            bytes_accessed=int(2 * N * C * HW * x_item + C * C * w_item + C * 4),
        )
        out = pl.pallas_call(
            se_fused_kernel,
            out_shape=jax.ShapeDtypeStruct((N, C, HW), x.dtype),
            grid_spec=pltpu.PrefetchScalarGridSpec(
                num_scalar_prefetch=0,
                grid=(N,),
                in_specs=[
                    pl.BlockSpec((pl.Squeezed(), C, HW), lambda i: (i, 0, 0)),
                    pl.BlockSpec((C, C), lambda i: (0, 0)),
                    pl.BlockSpec((C, 1), lambda i: (0, 0)),
                ],
                out_specs=pl.BlockSpec((pl.Squeezed(), C, HW), lambda i: (i, 0, 0)),
            ),
            compiler_params=pltpu.CompilerParams(
                dimension_semantics=("parallel",),
                vmem_limit_bytes=vmem_limit,
            ),
            cost_estimate=cost,
        )(x_flat, w2d, b2d)
        return out.reshape(N, C, H, W)

    # ---- tiled two-pass path (large feature maps / forced) ----
    if hw_tile is None:
        hw_tile = HW
        for cand in (4096, 2048, 1024, 512, 256, 128):
            if HW % cand == 0 and 4 * C * cand * x_item <= 8 * 1024 * 1024:
                hw_tile = cand
                break
    assert HW % hw_tile == 0, "hw_tile must divide H*W"
    n_hw = HW // hw_tile

    # Pass 1: pooled channel means + 1x1-conv excite -> s of shape (N, C, 1) f32.
    pool_cost = pl.CostEstimate(
        flops=int(N * C * HW + 2 * N * C * C),
        transcendentals=0,
        bytes_accessed=int(N * C * HW * x_item + C * C * w_item + N * C * 4),
    )
    s = pl.pallas_call(
        functools.partial(se_pool_excite_kernel, inv_hw=float(1.0 / HW)),
        out_shape=jax.ShapeDtypeStruct((N, C, 1), jnp.float32),
        grid_spec=pltpu.PrefetchScalarGridSpec(
            num_scalar_prefetch=0,
            grid=(N, n_hw),
            in_specs=[
                pl.BlockSpec((pl.Squeezed(), C, hw_tile), lambda i, j: (i, 0, j)),
                pl.BlockSpec((C, C), lambda i, j: (0, 0)),
                pl.BlockSpec((C, 1), lambda i, j: (0, 0)),
            ],
            out_specs=pl.BlockSpec((pl.Squeezed(), C, 1), lambda i, j: (i, 0, 0)),
            scratch_shapes=[pltpu.VMEM((C, 1), jnp.float32)],
        ),
        compiler_params=pltpu.CompilerParams(
            dimension_semantics=("parallel", "arbitrary"),
            vmem_limit_bytes=32 * 1024 * 1024,
        ),
        cost_estimate=pool_cost,
    )(x_flat, w2d, b2d)

    # Pass 2: lane-dense elementwise scale; both grid axes "parallel" (megacore).
    scale_cost = pl.CostEstimate(
        flops=int(N * C * HW),
        transcendentals=0,
        bytes_accessed=int(2 * N * C * HW * x_item + N * C * 4),
    )
    out = pl.pallas_call(
        se_scale_kernel,
        out_shape=jax.ShapeDtypeStruct((N, C, HW), x.dtype),
        grid_spec=pltpu.PrefetchScalarGridSpec(
            num_scalar_prefetch=0,
            grid=(N, n_hw),
            in_specs=[
                pl.BlockSpec((pl.Squeezed(), C, hw_tile), lambda i, j: (i, 0, j)),
                pl.BlockSpec((pl.Squeezed(), C, 1), lambda i, j: (i, 0, 0)),
            ],
            out_specs=pl.BlockSpec((pl.Squeezed(), C, hw_tile), lambda i, j: (i, 0, j)),
        ),
        compiler_params=pltpu.CompilerParams(
            dimension_semantics=("parallel", "parallel"),
            vmem_limit_bytes=32 * 1024 * 1024,
        ),
        cost_estimate=scale_cost,
    )(x_flat, s)
    return out.reshape(N, C, H, W)


def se_block_ref(x, weight, bias):
    # Pure-JAX reference matching PyTorch semantics (no sigmoid in the module).
    pooled = jnp.mean(x, axis=(2, 3), keepdims=True)               # (N, C, 1, 1)
    w2d = weight.reshape(weight.shape[0], weight.shape[1])         # (C, C)
    s = jnp.einsum('oc,ncij->noij', w2d, pooled) + bias[None, :, None, None]
    return x * s


if __name__ == "__main__":
    key = jax.random.PRNGKey(0)
    k1, k2, k3 = jax.random.split(key, 3)

    N, C, H, W = 2, 4, 16, 16
    x = jax.random.normal(k1, (N, C, H, W), dtype=jnp.float32)
    # Shapes from nn.Conv2d(C, C, kernel_size=1).
    weight = jax.random.normal(k2, (C, C, 1, 1), dtype=jnp.float32) * 0.1
    bias = jax.random.normal(k3, (C,), dtype=jnp.float32) * 0.1

    ref = se_block_ref(x, weight, bias)

    # Fused whole-(C,HW) path (small/medium shapes).
    out_fused = jax.block_until_ready(se_block(x, weight, bias))
    assert out_fused.shape == (N, C, H, W)
    assert jnp.allclose(out_fused, ref, atol=1e-5, rtol=1e-5), "fused path mismatch"

    # Tiled two-pass path (same code used for large feature maps / v7x VMEM).
    out_tiled = jax.block_until_ready(
        se_block(x, weight, bias, force_tiled=True, hw_tile=128))
    assert jnp.allclose(out_tiled, ref, atol=1e-5, rtol=1e-5), "tiled path mismatch"

    print("KERNEL_OK")
</pallas_src>

<mosaic_0001>
module attributes {stable_mosaic.version = 11 : i64} {
  func.func @se_fused_kernel(%arg0: i32, %arg1: memref<1x4x256xf32, #tpu.memory_space<vmem>>, %arg2: memref<4x4xf32, #tpu.memory_space<vmem>>, %arg3: memref<4x1xf32, #tpu.memory_space<vmem>>, %arg4: memref<1x4x256xf32, #tpu.memory_space<vmem>>) attributes {dimension_semantics = [#tpu.dimension_semantics<parallel>], iteration_bounds = array<i64: 2>, scalar_prefetch = 0 : i64, scratch_operands = 0 : i64, tpu.core_type = #tpu.core_type<tc>, window_params = [{transform_indices = @transform_0, window_bounds = array<i64: 1, 4, 256>}, {pipeline_mode = #tpu.pipeline_mode<synchronous>, transform_indices = @transform_1, window_bounds = array<i64: 4, 4>}, {pipeline_mode = #tpu.pipeline_mode<synchronous>, transform_indices = @transform_2, window_bounds = array<i64: 4, 1>}, {transform_indices = @transform_3, window_bounds = array<i64: 1, 4, 256>}]} {
    %c0 = arith.constant 0 : index
    %c0_0 = arith.constant 0 : index
    %c0_1 = arith.constant 0 : index
    %0 = vector.load %arg1[%c0, %c0_0, %c0_1] : memref<1x4x256xf32, #tpu.memory_space<vmem>>, vector<1x4x256xf32>
    %1 = vector.shape_cast %0 : vector<1x4x256xf32> to vector<4x256xf32>
    %cst = arith.constant dense<0.000000e+00> : vector<4xf32>
    %2 = vector.multi_reduction <add>, %1, %cst [1] : vector<4x256xf32> to vector<4xf32>
    %3 = vector.shape_cast %2 : vector<4xf32> to vector<4x1xf32>
    %cst_2 = arith.constant 2.560000e+02 : f32
    %4 = vector.broadcast %cst_2 : f32 to vector<4x1xf32>
    %5 = arith.divf %3, %4 : vector<4x1xf32>
    %c0_3 = arith.constant 0 : index
    %c0_4 = arith.constant 0 : index
    %6 = vector.load %arg2[%c0_3, %c0_4] : memref<4x4xf32, #tpu.memory_space<vmem>>, vector<4x4xf32>
    %cst_5 = arith.constant dense<0.000000e+00> : vector<4x1xf32>
    %7 = tpu.matmul %6, %5, %cst_5 {dimension_numbers = #tpu.dot_dimension_numbers<[1], [0], [0], [1], [0, 0, 1, 1], [], []>} : vector<4x4xf32>, vector<4x1xf32>, vector<4x1xf32> -> vector<4x1xf32>
    %c0_6 = arith.constant 0 : index
    %c0_7 = arith.constant 0 : index
    %8 = vector.load %arg3[%c0_6, %c0_7] : memref<4x1xf32, #tpu.memory_space<vmem>>, vector<4x1xf32>
    %9 = arith.addf %7, %8 : vector<4x1xf32>
    %10 = vector.broadcast %9 : vector<4x1xf32> to vector<4x256xf32>
    %11 = arith.mulf %1, %10 : vector<4x256xf32>
    %c0_8 = arith.constant 0 : index
    %c0_9 = arith.constant 0 : index
    %c0_10 = arith.constant 0 : index
    %12 = vector.load %arg4[%c0_8, %c0_9, %c0_10] : memref<1x4x256xf32, #tpu.memory_space<vmem>>, vector<1x4x256xf32>
    %13 = vector.shape_cast %12 : vector<1x4x256xf32> to vector<4x256xf32>
    %14 = vector.shape_cast %11 : vector<4x256xf32> to vector<1x4x256xf32>
    tpu.vector_store %arg4[%c0_8, %c0_9, %c0_10], %14 {strides = array<i32>} : memref<1x4x256xf32, #tpu.memory_space<vmem>>, vector<1x4x256xf32>,
    return
  }
  func.func @transform_0(%arg0: i32) -> (i32, i32, i32) {
    %c0_i32 = arith.constant 0 : i32
    %c0_i32_0 = arith.constant 0 : i32
    %c0_i32_1 = arith.constant 0 : i32
    return %arg0, %c0_i32, %c0_i32_0 : i32, i32, i32
  }
  func.func @transform_1(%arg0: i32) -> (i32, i32) {
    %c0_i32 = arith.constant 0 : i32
    %c0_i32_0 = arith.constant 0 : i32
    %c0_i32_1 = arith.constant 0 : i32
    return %c0_i32, %c0_i32_0 : i32, i32
  }
  func.func @transform_2(%arg0: i32) -> (i32, i32) {
    %c0_i32 = arith.constant 0 : i32
    %c0_i32_0 = arith.constant 0 : i32
    %c0_i32_1 = arith.constant 0 : i32
    return %c0_i32, %c0_i32_0 : i32, i32
  }
  func.func @transform_3(%arg0: i32) -> (i32, i32, i32) {
    %c0_i32 = arith.constant 0 : i32
    %c0_i32_0 = arith.constant 0 : i32
    %c0_i32_1 = arith.constant 0 : i32
    return %arg0, %c0_i32, %c0_i32_0 : i32, i32, i32
  }
}

</mosaic_0001>

<llo_original>
// kernel: tpu_custom_call.1
$region0: #{tpu_custom_call.1}
  #allocation0 [shape = 'u32[]', space=smem, size = 0x4, offset = 0x4, fixed_abs, tag = 'smem constant byte address 0x4 - core index']
  #allocation1 [shape = 'u32[72,128]{1,0:T(1,128)}', space=vmem, size = 0x9000, scoped, tag = 'internal scratch']
  %s0 = inlined_call_operand.hbm [shape: f32[2,4,256], index: 0, kind: input, shape index: {}]
  %s1 = inlined_call_operand.vmem [shape: f32[4,4], index: 1, kind: input, shape index: {}]
  %s2 = inlined_call_operand.vmem [shape: f32[4,1], index: 2, kind: input, shape index: {}]
  %s3 = inlined_call_operand.hbm [shape: f32[2,4,256], index: 3, kind: output, shape index: {}]
  %s4 = sld [smem:[#allocation0]]
  $region49: #{tpu_custom_call.1} parent=0
    _
  %s6 = ssub.s32 1, %s4
  %s7 = scalar_select 0, %s6, %s4
  $region1: #{tpu_custom_call.1} parent=0
    #allocation2 [shape = 'u8[8192]{0}', space=vmem, size = 0x2000, scoped, tag = 'input window, operand 0']
    #allocation3 [shape = 's32[2]{0}', space=sflag, size = 0x8, scoped, tag = 'scoped memory for tpu_custom_call.1']
    #allocation4 [shape = 's32[2]{0}', space=sflag, size = 0x8, scoped, tag = 'scoped memory for tpu_custom_call.1']
    #allocation5 [shape = 'u8[8192]{0}', space=vmem, size = 0x2000, scoped, tag = 'output window, operand 0']
    %8 = vsyncpa [#allocation3], 0
    %s9 = scalar_lea.sflag [#allocation3], 1
    %10 = vsyncpa %s9, 0
    %11 = vsyncpa [#allocation4], 0
    %s12 = scalar_lea.sflag [#allocation4], 1
    %13 = vsyncpa %s12, 0
    loop: start=0, step=1, limit=4
    $region2: #{tpu_custom_call.1} parent=1 // loop_pre_header
      _
    $region3: #{tpu_custom_call.1} parent=1 // loop_header
      %s15 = sphi 0, %s19
      %p16 = scmp.ge.s32.totalorder %s15, 4
      %s25 = sphi 0, %s27
      %s28 = sphi 0, %s25
      %s29 = sphi 0, %s28
      %s45 = sphi 0, %s29
      %s49 = sphi 0, %s49
      %s51 = sphi 0, %s49
      %s52 = sphi 0, %s51
      %s66 = sphi 0, %s52
      %s70 = sphi 0, %s70
      %s72 = sphi 0, %s70
      %s73 = sphi 0, %s72
      %s87 = sphi 0, %s73
      %s93 = sphi 0, %s95
      %s96 = sphi 0, %s93
      %s97 = sphi 0, %s96
      %s113 = sphi 0, %s97
    $region4: #{tpu_custom_call.1} parent=1 // loop_header_branch
      %18 = sbr.rel (%p16) target = $region8
    $region5: #{tpu_custom_call.1} parent=1 // loop_body
      %s20 = ssub.s32 %s15, 1
      %s21 = ssub.s32 %s15, 2
      %s22 = sadd.s32 %s15, 1
      %s23 = ssub.s32 %s15, %s22
      %p24 = scmp.eq.s32.totalorder %s23, 0
      %s26 = sadd.s32 %s25, 1
      %s27 = scalar_select %p24, %s25, %s26
      %p30 = pneg %p24
      %p31 = scmp.eq.s32.totalorder %s15, 1
      %p32 = por %p30, %p31
      %p33 = scmp.ne.s32.totalorder %s25, %s28
      %p34 = scmp.eq.s32.totalorder %s15, 0
      %p35 = por %p33, %p34
      %p36 = scmp.ne.s32.totalorder %s25, %s28
      %p37 = scmp.eq.s32.totalorder %s20, 1
      %p38 = por %p36, %p37
      %p39 = scmp.ne.s32.totalorder %s28, %s29
      %p40 = scmp.eq.s32.totalorder %s20, 0
      %p41 = por %p39, %p40
      %p42 = scmp.ne.s32.totalorder %s28, %s29
      %p43 = scmp.eq.s32.totalorder %s21, 1
      %p44 = por %p42, %p43
      %p46 = scmp.ne.s32.totalorder %s29, %s45
      %p47 = scmp.eq.s32.totalorder %s21, 0
      %p48 = por %p46, %p47
      %s50 = sadd.s32 %s49, 1
      %p53 = scmp.eq.s32.totalorder %s15, 1
      %p54 = scmp.ne.s32.totalorder %s49, %s51
      %p55 = scmp.eq.s32.totalorder %s15, 0
      %p56 = por %p54, %p55
      %p57 = scmp.ne.s32.totalorder %s49, %s51
      %p58 = scmp.eq.s32.totalorder %s20, 1
      %p59 = por %p57, %p58
      %p60 = scmp.ne.s32.totalorder %s51, %s52
      %p61 = scmp.eq.s32.totalorder %s20, 0
      %p62 = por %p60, %p61
      %p63 = scmp.ne.s32.totalorder %s51, %s52
      %p64 = scmp.eq.s32.totalorder %s21, 1
      %p65 = por %p63, %p64
      %p67 = scmp.ne.s32.totalorder %s52, %s66
      %p68 = scmp.eq.s32.totalorder %s21, 0
      %p69 = por %p67, %p68
      %s71 = sadd.s32 %s70, 1
      %p74 = scmp.eq.s32.totalorder %s15, 1
      %p75 = scmp.ne.s32.totalorder %s70, %s72
      %p76 = scmp.eq.s32.totalorder %s15, 0
      %p77 = por %p75, %p76
      %p78 = scmp.ne.s32.totalorder %s70, %s72
      %p79 = scmp.eq.s32.totalorder %s20, 1
      %p80 = por %p78, %p79
      %p81 = scmp.ne.s32.totalorder %s72, %s73
      %p82 = scmp.eq.s32.totalorder %s20, 0
      %p83 = por %p81, %p82
      %p84 = scmp.ne.s32.totalorder %s72, %s73
      %p85 = scmp.eq.s32.totalorder %s21, 1
      %p86 = por %p84, %p85
      %p88 = scmp.ne.s32.totalorder %s73, %s87
      %p89 = scmp.eq.s32.totalorder %s21, 0
      %p90 = por %p88, %p89
      %s91 = ssub.s32 %s15, %s22
      %p92 = scmp.eq.s32.totalorder %s91, 0
      %s94 = sadd.s32 %s93, 1
      %s95 = scalar_select %p92, %s93, %s94
      %p98 = pneg %p92
      %p99 = scmp.eq.s32.totalorder %s15, 1
      %p100 = por %p98, %p99
      %p101 = scmp.ne.s32.totalorder %s93, %s96
      %p102 = scmp.eq.s32.totalorder %s15, 0
      %p103 = por %p101, %p102
      %p104 = scmp.ne.s32.totalorder %s93, %s96
      %p105 = scmp.eq.s32.totalorder %s20, 1
      %p106 = por %p104, %p105
      %p107 = scmp.ne.s32.totalorder %s96, %s97
      %p108 = scmp.eq.s32.totalorder %s20, 0
      %p109 = por %p107, %p108
      %p110 = scmp.ne.s32.totalorder %s96, %s97
      %p111 = scmp.eq.s32.totalorder %s21, 1
      %p112 = por %p110, %p111
      %p114 = scmp.ne.s32.totalorder %s97, %s113
      %p115 = scmp.eq.s32.totalorder %s21, 0
      %p116 = por %p114, %p115
      %p117 = scmp.le.s32.totalorder 1, %s15
      %p118 = scmp.lt.s32.totalorder %s15, 3
      %p119 = pnand %p117, %p118
      %p120 = pneg %p119
      // Predicated region
      $region9: #{tpu_custom_call.1} parent=5 // pred_check
        _
      $region10: #{tpu_custom_call.1} parent=5 // pred_check_branch
        %122 = sbr.rel (%p119) target = $region12
      $region11: #{tpu_custom_call.1} parent=5 // pred_region
        %s123 = ssub.s32 %s15, 1
        // Predicated region
        $region13: #{tpu_custom_call.1} parent=11 // pred_check
          %p124 = pneg %p62
        $region14: #{tpu_custom_call.1} parent=11 // pred_check_branch
          %126 = sbr.rel (%p124) target = $region16
        $region15: #{tpu_custom_call.1} parent=11 // pred_region
          _
        $region16: #{tpu_custom_call.1} parent=11 // pred_fallthru
          _
        // Predicated region
        $region17: #{tpu_custom_call.1} parent=11 // pred_check
          %p127 = pneg %p83
        $region18: #{tpu_custom_call.1} parent=11 // pred_check_branch
          %129 = sbr.rel (%p127) target = $region20
        $region19: #{tpu_custom_call.1} parent=11 // pred_region
          _
        $region20: #{tpu_custom_call.1} parent=11 // pred_fallthru
          _
      $region12: #{tpu_custom_call.1} parent=5 // pred_fallthru
        _
      %p130 = scmp.lt.s32.totalorder %s15, 2
      // Predicated region
      $region21: #{tpu_custom_call.1} parent=5 // pred_check
        %p131 = pneg %p130
      $region22: #{tpu_custom_call.1} parent=5 // pred_check_branch
        %133 = sbr.rel (%p131) target = $region24
      $region23: #{tpu_custom_call.1} parent=5 // pred_region
        // Predicated region
        $region25: #{tpu_custom_call.1} parent=23 // pred_check
          %p134 = pneg %p35
        $region26: #{tpu_custom_call.1} parent=23 // pred_check_branch
          %136 = sbr.rel (%p134) target = $region28
        $region27: #{tpu_custom_call.1} parent=23 // pred_region
          %s137 = sand.u32 %s25, 1
          %s138 = scalar_lea.sflag [#allocation3], %s137
          %s139 = sand.u32 %s25, 1
          %s140 = smul.addr %s139, 8
          %s141 = scalar_lea.vmem [#allocation2], %s140
          %143 = vsyncadd %s138, 0
          %s144 = smul.addr %s15, 2
          %s145 = smul.addr %s144, 4
          %s146 = scalar_lea.hbm %s0, %s145
          %s148 = sshll.u32 %s146, 4
          %s149 = int_to_ptr.hbm [resolvable:$true] %s148
          %s150 = sshll.u32 %s141, 4
          %s151 = int_to_ptr.vmem [resolvable:$true] %s150
          %153 = dma.hbm_to_vmem [thread:$0]  %s149, 128, %s151, %s138
        $region28: #{tpu_custom_call.1} parent=23 // pred_fallthru
          _
      $region24: #{tpu_custom_call.1} parent=5 // pred_fallthru
        _
      %p154 = scmp.le.s32.totalorder 1, %s15
      %p155 = scmp.lt.s32.totalorder %s15, 3
      %p156 = pnand %p154, %p155
      %p157 = pneg %p156
      // Predicated region
      $region29: #{tpu_custom_call.1} parent=5 // pred_check
        _
      $region30: #{tpu_custom_call.1} parent=5 // pred_check_branch
        %159 = sbr.rel (%p156) target = $region32
      $region31: #{tpu_custom_call.1} parent=5 // pred_region
        %s160 = ssub.s32 %s15, 1
        %s161 = sand.u32 %s28, 1
        %s162 = scalar_lea.sflag [#allocation3], %s161
        %s163 = sand.u32 %s28, 1
        %s164 = smul.addr %s163, 8
        %s165 = scalar_lea.vmem [#allocation2], %s164
        // Predicated region
        $region33: #{tpu_custom_call.1} parent=31 // pred_check
          %p166 = pneg %p41
        $region34: #{tpu_custom_call.1} parent=31 // pred_check_branch
          %168 = sbr.rel (%p166) target = $region36
        $region35: #{tpu_custom_call.1} parent=31 // pred_region
          %170 = dma.done %s162, 128
        $region36: #{tpu_custom_call.1} parent=31 // pred_fallthru
          _
        %s171 = sand.u32 %s28, 1
        %s172 = scalar_lea.sflag [#allocation3], %s171
        %s173 = sand.u32 %s28, 1
        %s174 = smul.addr %s173, 8
        %s175 = scalar_lea.vmem [#allocation2], %s174
        %p176 = pneg %p41
        %p177 = pneg %p38
        %p178 = pneg %p62
        %p179 = pneg %p59
        %p180 = pneg %p83
        %p181 = pneg %p80
        %p182 = pneg %p109
        %p183 = pneg %p106
        %s184 = sand.u32 %s96, 1
        %s185 = scalar_lea.sflag [#allocation4], %s184
        %s186 = sand.u32 %s96, 1
        %s187 = smul.addr %s186, 8
        %s188 = scalar_lea.vmem [#allocation5], %s187
        %v189 = vld [vmem:[%s165] sm:$0xff]
        %191 = vst [vmem:[#allocation1] ss:$2 sm:$0xff] %v189
        %v192 = vld.sshfl [vmem:[#allocation1] sm:$0xff pattern:$0x75316420]
        %v193 = vld.sshfl [vmem:[#allocation1 + $0x8] sm:$0xff pattern:$0x75316420]
        %vm196 = vcmask 1043456
        %v197 = vsel %vm196, %v192, 0.0
        %v198 = vsel %vm196, %v193, 0.0
        %v199 = vadd.f32 %v197, %v198
        %200 = vadd.xlane.f32.xlu0 %v199
        %v201 = vpop.xlane.xlu0 %200
        %v202 = vrcp.pop 256.0
        %v203 = vmul.f32 256.0, %v202
        %v204 = vsub.f32 1.0, %v203
        %v205 = vmul.f32 %v202, %v204
        %v206 = vadd.f32 %v202, %v205
        %vm207 = vweird.f32 %v202
        %v208 = vsel %vm207, %v202, %v206
        %v209 = vmul.f32 %v201, %v208
        %v210 = vld [vmem:[%s1] sm:$0xf]
        %v211 = vld [vmem:[%s2] sm:$0xf]
        %vm212 = vcmask 31744
        %v214 = vsel %vm212, %v210, 0
        %v217 = vsel %vm196, %v209, 0
        %219 = vmatpush.msra.mxu0 0.0
        %220 = vmatpush.msra.mxu0 0.0
        %221 = vmatpush.msra.mxu0 0.0
        %222 = vmatpush.msra.mxu0 0.0
        %223 = vmatpush.msra.mxu0 0.0
        %224 = vmatpush.msra.mxu0 0.0
        %225 = vmatpush.msra.mxu0 0.0
        %226 = vmatpush.msra.mxu0 0.0
        %227 = vmatpush.msra.mxu0 0.0
        %228 = vmatpush.msra.mxu0 0.0
        %229 = vmatpush.msra.mxu0 0.0
        %230 = vmatpush.msra.mxu0 0.0
        %231 = vmatpush.msra.mxu0 0.0
        %232 = vmatpush.msra.mxu0 0.0
        %233 = vmatpush.msra.mxu0 0.0
        %234 = vmatpush.msra.mxu0 %v217
        %235 = vmatmul.f32.gmra.mxu0 %v214
        %v236 = vpop.f32.mrf.mxu0
        %v237 = vadd.f32 %v211, %v236
        %238 = vdwg.mxu0
        %240 = vset.pattern.permute.xlu0 0
        %241 = vperm.xlu0 %240, %v237
        %v242 = vpop.permute.xlu0 %241
        %v244 = vunpack.c.l.s4 839922192
        %v245 = vunpack.c.0.s8 %v244
        %v246 = vperm.slane %v242, %v245
        %v248 = vmul.f32 %v189, %v246
        %249 = vst [vmem:[%s188] sm:$0xff] %v248
        %s250 = sand.u32 %s96, 1
        %s251 = scalar_lea.sflag [#allocation4], %s250
        %s252 = sand.u32 %s96, 1
        %s253 = smul.addr %s252, 8
        %s254 = scalar_lea.vmem [#allocation5], %s253
        // Predicated region
        $region37: #{tpu_custom_call.1} parent=31 // pred_check
          %p255 = pneg %p106
        $region38: #{tpu_custom_call.1} parent=31 // pred_check_branch
          %257 = sbr.rel (%p255) target = $region40
        $region39: #{tpu_custom_call.1} parent=31 // pred_region
          %259 = vsyncadd %s251, 0
          %s260 = smul.addr %s20, 2
          %s261 = smul.addr %s260, 4
          %s262 = scalar_lea.hbm %s3, %s261
          %s264 = sshll.u32 %s254, 4
          %s265 = int_to_ptr.vmem [resolvable:$true] %s264
          %s266 = sshll.u32 %s262, 4
          %s267 = int_to_ptr.hbm [resolvable:$true] %s266
          %269 = dma.vmem_to_hbm [thread:$0]  %s265, 128, %s267, %s251
        $region40: #{tpu_custom_call.1} parent=31 // pred_fallthru
          _
      $region32: #{tpu_custom_call.1} parent=5 // pred_fallthru
        _
      %p270 = scmp.le.s32.totalorder 2, %s15
      // Predicated region
      $region41: #{tpu_custom_call.1} parent=5 // pred_check
        %p271 = pneg %p270
      $region42: #{tpu_custom_call.1} parent=5 // pred_check_branch
        %273 = sbr.rel (%p271) target = $region44
      $region43: #{tpu_custom_call.1} parent=5 // pred_region
        %s274 = ssub.s32 %s15, 2
        // Predicated region
        $region45: #{tpu_custom_call.1} parent=43 // pred_check
          %p275 = pneg %p112
        $region46: #{tpu_custom_call.1} parent=43 // pred_check_branch
          %277 = sbr.rel (%p275) target = $region48
        $region47: #{tpu_custom_call.1} parent=43 // pred_region
          %s278 = sand.u32 %s97, 1
          %s279 = scalar_lea.sflag [#allocation4], %s278
          %s280 = sand.u32 %s97, 1
          %s281 = smul.addr %s280, 8
          %s282 = scalar_lea.vmem [#allocation5], %s281
          %284 = dma.done %s279, 128
        $region48: #{tpu_custom_call.1} parent=43 // pred_fallthru
          _
      $region44: #{tpu_custom_call.1} parent=5 // pred_fallthru
        _
    $region6: #{tpu_custom_call.1} parent=1 // loop_footer
      %s19 = sadd.s32 1, %s15
    $region7: #{tpu_custom_call.1} parent=1 // loop_footer_branch
      %14 = sbr.rel target = $region3
    $region8: #{tpu_custom_call.1} parent=1 // loop_exit
      _
    %285 = vsyncpa [#allocation3], 1
    %s286 = scalar_lea.sflag [#allocation3], 1
    %287 = vsyncpa %s286, 1
    %288 = vsyncpa [#allocation4], 1
    %s289 = scalar_lea.sflag [#allocation4], 1
    %290 = vsyncpa %s289, 1

</llo_original>
